<compile_context>
chip_gen: v5e
topology: v5e:2x2
jax: 0.10.0
libtpu: 0.0.40
codegen_flags: <defaults>
</compile_context>

<pallas_src>
import functools
import math

import jax
import jax.numpy as jnp
from jax import lax
from jax.experimental import pallas as pl
from jax.experimental.pallas import tpu as pltpu

_LANE = 128


def _flash_attn_kernel(q_ref, k_ref, v_ref, o_ref, m_sc, l_sc, acc_sc, *,
                       scale, num_heads_blk, head_dim, mxu_dtype):
    """One (head-block, q-tile, kv-tile) step of online-softmax attention.

    q_ref : (hb, tq, d)   resident across the KV grid axis
    k_ref : (hb, tk, d)
    v_ref : (hb, tk, d)
    o_ref : (1, tq, hb*d) head-packed, written only on the last KV step
    m_sc, l_sc : (hb, tq, 1) f32 running max / denominator (VMEM scratch)
    acc_sc     : (hb, tq, d) f32 running weighted sum      (VMEM scratch)
    """
    kv = pl.program_id(2)

    @pl.when(kv == 0)
    def _init():
        m_sc[...] = jnp.full(m_sc.shape, -jnp.inf, dtype=m_sc.dtype)
        l_sc[...] = jnp.zeros(l_sc.shape, dtype=l_sc.dtype)
        acc_sc[...] = jnp.zeros(acc_sc.shape, dtype=acc_sc.dtype)

    q = q_ref[...]
    k = k_ref[...]
    v = v_ref[...]
    if mxu_dtype is not None and q.dtype != mxu_dtype:
        q = q.astype(mxu_dtype)
        k = k.astype(mxu_dtype)
        v = v.astype(mxu_dtype)
    # Fold 1/sqrt(embed_dim) into q (hb*tq*d mults, not hb*tq*tk).
    q = q * jnp.asarray(scale, dtype=q.dtype)

    # Scores: contract head_dim of q and k directly (no explicit k.T).
    # (hb, tq, tk): lane dim tk is >=128 for real tiles -> dense intermediates.
    s = lax.dot_general(q, k, (((2,), (2,)), ((0,), (0,))),
                        preferred_element_type=jnp.float32)

    m_prev = m_sc[...]
    m_new = jnp.maximum(m_prev, jnp.max(s, axis=-1, keepdims=True))
    alpha = jnp.exp(m_prev - m_new)            # rescale of previous partials
    p = jnp.exp(s - m_new)                     # f32 softmax numerator

    l_sc[...] = alpha * l_sc[...] + jnp.sum(p, axis=-1, keepdims=True)

    pv = lax.dot_general(p.astype(v.dtype), v, (((2,), (1,)), ((0,), (0,))),
                         preferred_element_type=jnp.float32)   # (hb, tq, d) f32
    acc_sc[...] = alpha * acc_sc[...] + pv
    m_sc[...] = m_new

    @pl.when(kv == pl.num_programs(2) - 1)
    def _finalize():
        # Exact reciprocal: only hb*tq values, so approx buys nothing.
        inv_l = pl.reciprocal(l_sc[...], approx=False)          # (hb, tq, 1)
        out = acc_sc[...] * inv_l                               # (hb, tq, d)
        d = head_dim
        # Head-packed, lane-dense store: (tq, hb*d) block, once per q tile.
        for hh in range(num_heads_blk):                         # static unroll
            o_ref[0, :, hh * d:(hh + 1) * d] = out[hh].astype(o_ref.dtype)


def _physical_vmem_bytes():
    """Best-effort per-core VMEM capacity; conservative fallback (v7x 64 MiB)."""
    try:
        info = pltpu.get_tpu_info()
        for attr in ("vmem_capacity_bytes", "vmem_bytes", "vmem_size_bytes"):
            val = getattr(info, attr, None)
            if val:
                return int(val)
    except Exception:
        pass
    return 64 * 1024 * 1024


def _working_set_bytes(hb, tq, tk, d, in_esz):
    """Rough per-step VMEM footprint: f32 score/prob intermediates, 128-lane
    padding of d<128 buffers, double-buffered pipeline blocks, scratch."""
    pad_d = -(-d // _LANE) * _LANE
    out_w = -(-(hb * d) // _LANE) * _LANE
    scores = 2 * hb * tq * tk * 4                # s and p (f32)
    q_blk = 2 * hb * tq * pad_d * in_esz         # double-buffered q block
    kv_blk = 2 * 2 * hb * tk * pad_d * in_esz    # double-buffered k + v blocks
    o_blk = 2 * tq * out_w * in_esz              # double-buffered packed output
    acc = hb * tq * pad_d * 4
    ml = 2 * hb * tq * _LANE * 4                 # m, l padded to 128 lanes
    return int(1.15 * (scores + q_blk + kv_blk + o_blk + acc + ml))


def attention(query, key, value, *, num_heads, embed_dim,
              block_q=None, block_kv=None, heads_per_block=None,
              mxu_dtype=None, vmem_limit_bytes=None):
    """Multi-head attention matching the PyTorch `Attention` module."""
    b, hn, d = query.shape
    h = num_heads
    assert hn % h == 0, "second dim must be num_heads * seq_len"
    n = hn // h
    bh = b * h

    # 'b (h n) d -> (b h) n d'  (pure reshape: heads are the outer factor).
    q = query.reshape(bh, n, d)
    k = key.reshape(bh, n, d)
    v = value.reshape(bh, n, d)

    in_esz = jnp.dtype(query.dtype).itemsize

    # ---- per-generation VMEM budget --------------------------------------
    phys_vmem = _physical_vmem_bytes()
    small_vmem = phys_vmem < 100 * 1024 * 1024      # v7x-class: 64 MiB/TC, 2 TCs
    budget = min(int(phys_vmem * 0.40), 48 * 1024 * 1024)
    if vmem_limit_bytes is None:
        vmem_limit_bytes = min(int(phys_vmem * 0.75), budget + 28 * 1024 * 1024)

    if block_q is None:
        block_q = 512 if small_vmem else 1024       # bigger q tiles on 128-MiB parts
    if block_kv is None:
        block_kv = 256 if small_vmem else 512

    # ---- head batching: smallest head count giving a >=128-lane packed output.
    # hb only amortizes per-step overhead (it does not deepen the MXU
    # contraction), so keep it minimal and budget-checked.
    divisors = [x for x in range(1, bh + 1) if bh % x == 0]
    if heads_per_block is None:
        want = max(1, -(-_LANE // d))               # ceil(128 / head_dim)
        hb = next((x for x in divisors if x >= want), bh)
    else:
        hb = max(1, math.gcd(bh, heads_per_block))

    # ---- sequence tiles ----------------------------------------------------
    tq = n if n <= block_q else block_q
    tk = n if n <= block_kv else block_kv
    assert n % tq == 0 and n % tk == 0, "sequence must tile evenly"
    assert (tq == n or tq % 8 == 0) and (tk == n or tk % 8 == 0)

    def _shrink():
        nonlocal tq, tk, hb
        if tk > 128 and tk % 2 == 0 and n % (tk // 2) == 0:
            tk //= 2
            return True
        if tq > 128 and tq % 2 == 0 and n % (tq // 2) == 0:
            tq //= 2
            return True
        smaller = [x for x in divisors if x < hb]
        if smaller:
            hb = smaller[-1]
            return True
        return False

    while _working_set_bytes(hb, tq, tk, d, in_esz) > budget and _shrink():
        pass

    # On 2-TensorCore parts, expose >= 2 blocks on the "parallel" sub-grid so
    # both cores get work (v7x only; v5e/v6e are single-TC).
    if small_vmem:
        while (bh // hb) * (n // tq) < 2:
            smaller = [x for x in divisors if x < hb]
            if smaller:
                hb = smaller[-1]
            elif tq > 8 and tq % 2 == 0 and n % (tq // 2) == 0:
                tq //= 2
            else:
                break

    grid = (bh // hb, n // tq, n // tk)
    # Module scales by sqrt(embed_dim) (not sqrt(head_dim)) -- intentional.
    scale = 1.0 / math.sqrt(embed_dim)

    q_spec = pl.BlockSpec((hb, tq, d), lambda g, qi, ki: (g, qi, 0))
    kv_spec = pl.BlockSpec((hb, tk, d), lambda g, qi, ki: (g, ki, 0))
    # Head-packed, lane-dense output block (last dim hb*d >= 128 when possible).
    o_spec = pl.BlockSpec((1, tq, hb * d), lambda g, qi, ki: (g, qi, 0))

    kernel = functools.partial(_flash_attn_kernel, scale=scale,
                               num_heads_blk=hb, head_dim=d,
                               mxu_dtype=mxu_dtype)

    out_packed = pl.pallas_call(
        kernel,
        out_shape=jax.ShapeDtypeStruct((bh // hb, n, hb * d), query.dtype),
        grid_spec=pltpu.PrefetchScalarGridSpec(
            num_scalar_prefetch=0,
            grid=grid,
            in_specs=[q_spec, kv_spec, kv_spec],
            out_specs=o_spec,
            scratch_shapes=[
                pltpu.VMEM((hb, tq, 1), jnp.float32),   # running max m
                pltpu.VMEM((hb, tq, 1), jnp.float32),   # running denom l
                pltpu.VMEM((hb, tq, d), jnp.float32),   # running weighted sum
            ],
        ),
        compiler_params=pltpu.CompilerParams(
            dimension_semantics=("parallel", "parallel", "arbitrary"),
            vmem_limit_bytes=int(vmem_limit_bytes),
        ),
    )(q, k, v)

    # Undo head packing: '(g) n (hb d) -> (b h) n d -> b (h n) d'.
    if hb == 1:
        return out_packed.reshape(b, hn, d)
    out = out_packed.reshape(bh // hb, n, hb, d).transpose(0, 2, 1, 3)
    return out.reshape(b, hn, d)


def _reference(query, key, value, *, num_heads, embed_dim):
    b, hn, d = query.shape
    h = num_heads
    n = hn // h
    q = query.reshape(b, h, n, d).astype(jnp.float32)
    k = key.reshape(b, h, n, d).astype(jnp.float32)
    v = value.reshape(b, h, n, d).astype(jnp.float32)
    s = jnp.einsum("bhnd,bhmd->bhnm", q, k) / math.sqrt(embed_dim)
    w = jax.nn.softmax(s, axis=-1)
    o = jnp.einsum("bhnm,bhmd->bhnd", w, v)
    return o.reshape(b, hn, d).astype(query.dtype)


if __name__ == "__main__":
    def _check(name, *, b, h, n, d, embed_dim, dtype, atol, rtol, **kw):
        k0 = jax.random.PRNGKey(0)
        kq, kk, kv = jax.random.split(k0, 3)
        qx = jax.random.normal(kq, (b, h * n, d), dtype=jnp.float32).astype(dtype)
        kx = jax.random.normal(kk, (b, h * n, d), dtype=jnp.float32).astype(dtype)
        vx = jax.random.normal(kv, (b, h * n, d), dtype=jnp.float32).astype(dtype)
        out = attention(qx, kx, vx, num_heads=h, embed_dim=embed_dim, **kw)
        out = jax.block_until_ready(out)
        ref = _reference(qx, kx, vx, num_heads=h, embed_dim=embed_dim)
        assert out.shape == (b, h * n, d), f"{name}: bad shape {out.shape}"
        ok = jnp.allclose(out.astype(jnp.float32), ref.astype(jnp.float32),
                          atol=atol, rtol=rtol)
        assert bool(ok), f"{name}: mismatch vs reference"

    # A: module-sized smoke test (batch=2, heads=2, seq=8, head_dim=32).
    _check("tiny_f32", b=2, h=2, n=8, d=32, embed_dim=32,
           dtype=jnp.float32, atol=1e-4, rtol=1e-4)
    # B: long sequence -> multiple KV tiles (online-softmax rescale path) and
    #    head-packed (hb*d = 128) lane-dense output.
    _check("long_f32", b=1, h=2, n=1024, d=64, embed_dim=128,
           dtype=jnp.float32, atol=1e-4, rtol=1e-4)
    # C: bf16 activations with bf16 MXU operands, f32 accumulation/softmax.
    _check("long_bf16", b=1, h=2, n=1024, d=64, embed_dim=128,
           dtype=jnp.bfloat16, atol=3e-2, rtol=3e-2,
           mxu_dtype=jnp.bfloat16)

    print("KERNEL_OK")
</pallas_src>

<mosaic_0001>
module attributes {stable_mosaic.version = 11 : i64} {
  func.func @_flash_attn_kernel(%arg0: i32, %arg1: i32, %arg2: i32, %arg3: memref<2x8x32xf32, #tpu.memory_space<vmem>>, %arg4: memref<2x8x32xf32, #tpu.memory_space<vmem>>, %arg5: memref<2x8x32xf32, #tpu.memory_space<vmem>>, %arg6: memref<1x8x64xf32, #tpu.memory_space<vmem>>, %arg7: memref<2x8x1xf32, #tpu.memory_space<vmem>>, %arg8: memref<2x8x1xf32, #tpu.memory_space<vmem>>, %arg9: memref<2x8x32xf32, #tpu.memory_space<vmem>>) attributes {dimension_semantics = [#tpu.dimension_semantics<parallel>, #tpu.dimension_semantics<parallel>, #tpu.dimension_semantics<arbitrary>], iteration_bounds = array<i64: 2, 1, 1>, scalar_prefetch = 0 : i64, scratch_operands = 3 : i64, tpu.core_type = #tpu.core_type<tc>, window_params = [{transform_indices = @transform_0, window_bounds = array<i64: 2, 8, 32>}, {transform_indices = @transform_1, window_bounds = array<i64: 2, 8, 32>}, {transform_indices = @transform_2, window_bounds = array<i64: 2, 8, 32>}, {transform_indices = @transform_3, window_bounds = array<i64: 1, 8, 64>}]} {
    %c0_i32 = arith.constant 0 : i32
    %0 = arith.cmpi eq, %arg2, %c0_i32 : i32
    %1 = arith.extui %0 : i1 to i32
    %c0_i32_0 = arith.constant 0 : i32
    %2 = arith.cmpi ne, %1, %c0_i32_0 : i32
    scf.if %2 {
      %cst_33 = arith.constant 0xFF800000 : f32
      %34 = vector.broadcast %cst_33 : f32 to vector<2x8x1xf32>
      %c0_34 = arith.constant 0 : index
      %c0_35 = arith.constant 0 : index
      %c0_36 = arith.constant 0 : index
      %35 = vector.load %arg7[%c0_34, %c0_35, %c0_36] : memref<2x8x1xf32, #tpu.memory_space<vmem>>, vector<2x8x1xf32>
      tpu.vector_store %arg7[%c0_34, %c0_35, %c0_36], %34 {strides = array<i32>} : memref<2x8x1xf32, #tpu.memory_space<vmem>>, vector<2x8x1xf32>,
      %cst_37 = arith.constant 0.000000e+00 : f32
      %36 = vector.broadcast %cst_37 : f32 to vector<2x8x1xf32>
      %c0_38 = arith.constant 0 : index
      %c0_39 = arith.constant 0 : index
      %c0_40 = arith.constant 0 : index
      %37 = vector.load %arg8[%c0_38, %c0_39, %c0_40] : memref<2x8x1xf32, #tpu.memory_space<vmem>>, vector<2x8x1xf32>
      tpu.vector_store %arg8[%c0_38, %c0_39, %c0_40], %36 {strides = array<i32>} : memref<2x8x1xf32, #tpu.memory_space<vmem>>, vector<2x8x1xf32>,
      %cst_41 = arith.constant 0.000000e+00 : f32
      %38 = vector.broadcast %cst_41 : f32 to vector<2x8x32xf32>
      %c0_42 = arith.constant 0 : index
      %c0_43 = arith.constant 0 : index
      %c0_44 = arith.constant 0 : index
      %39 = vector.load %arg9[%c0_42, %c0_43, %c0_44] : memref<2x8x32xf32, #tpu.memory_space<vmem>>, vector<2x8x32xf32>
      tpu.vector_store %arg9[%c0_42, %c0_43, %c0_44], %38 {strides = array<i32>} : memref<2x8x32xf32, #tpu.memory_space<vmem>>, vector<2x8x32xf32>,
    } else {
    }
    %c0 = arith.constant 0 : index
    %c0_1 = arith.constant 0 : index
    %c0_2 = arith.constant 0 : index
    %3 = vector.load %arg3[%c0, %c0_1, %c0_2] : memref<2x8x32xf32, #tpu.memory_space<vmem>>, vector<2x8x32xf32>
    %c0_3 = arith.constant 0 : index
    %c0_4 = arith.constant 0 : index
    %c0_5 = arith.constant 0 : index
    %4 = vector.load %arg4[%c0_3, %c0_4, %c0_5] : memref<2x8x32xf32, #tpu.memory_space<vmem>>, vector<2x8x32xf32>
    %c0_6 = arith.constant 0 : index
    %c0_7 = arith.constant 0 : index
    %c0_8 = arith.constant 0 : index
    %5 = vector.load %arg5[%c0_6, %c0_7, %c0_8] : memref<2x8x32xf32, #tpu.memory_space<vmem>>, vector<2x8x32xf32>
    %cst = arith.constant 0.176776692 : f32
    %6 = vector.broadcast %cst : f32 to vector<2x8x32xf32>
    %7 = arith.mulf %3, %6 : vector<2x8x32xf32>
    %cst_9 = arith.constant dense<0.000000e+00> : vector<2x8x8xf32>
    %8 = tpu.matmul %7, %4, %cst_9 {dimension_numbers = #tpu.dot_dimension_numbers<[2], [2], [1], [1], [0, 0, 0, 1, 1, 1], [0], [0]>} : vector<2x8x32xf32>, vector<2x8x32xf32>, vector<2x8x8xf32> -> vector<2x8x8xf32>
    %c0_10 = arith.constant 0 : index
    %c0_11 = arith.constant 0 : index
    %c0_12 = arith.constant 0 : index
    %9 = vector.load %arg7[%c0_10, %c0_11, %c0_12] : memref<2x8x1xf32, #tpu.memory_space<vmem>>, vector<2x8x1xf32>
    %cst_13 = arith.constant dense<0xFF800000> : vector<2x8xf32>
    %10 = vector.multi_reduction <maximumf>, %8, %cst_13 [2] : vector<2x8x8xf32> to vector<2x8xf32>
    %11 = vector.shape_cast %10 : vector<2x8xf32> to vector<2x8x1xf32>
    %12 = arith.maximumf %9, %11 : vector<2x8x1xf32>
    %13 = arith.subf %9, %12 : vector<2x8x1xf32>
    %14 = math.exp %13 : vector<2x8x1xf32>
    %15 = vector.broadcast %12 : vector<2x8x1xf32> to vector<2x8x8xf32>
    %16 = arith.subf %8, %15 : vector<2x8x8xf32>
    %17 = math.exp %16 : vector<2x8x8xf32>
    %c0_14 = arith.constant 0 : index
    %c0_15 = arith.constant 0 : index
    %c0_16 = arith.constant 0 : index
    %18 = vector.load %arg8[%c0_14, %c0_15, %c0_16] : memref<2x8x1xf32, #tpu.memory_space<vmem>>, vector<2x8x1xf32>
    %19 = arith.mulf %14, %18 : vector<2x8x1xf32>
    %cst_17 = arith.constant dense<0.000000e+00> : vector<2x8xf32>
    %20 = vector.multi_reduction <add>, %17, %cst_17 [2] : vector<2x8x8xf32> to vector<2x8xf32>
    %21 = vector.shape_cast %20 : vector<2x8xf32> to vector<2x8x1xf32>
    %22 = arith.addf %19, %21 : vector<2x8x1xf32>
    %c0_18 = arith.constant 0 : index
    %c0_19 = arith.constant 0 : index
    %c0_20 = arith.constant 0 : index
    %23 = vector.load %arg8[%c0_18, %c0_19, %c0_20] : memref<2x8x1xf32, #tpu.memory_space<vmem>>, vector<2x8x1xf32>
    tpu.vector_store %arg8[%c0_18, %c0_19, %c0_20], %22 {strides = array<i32>} : memref<2x8x1xf32, #tpu.memory_space<vmem>>, vector<2x8x1xf32>,
    %cst_21 = arith.constant dense<0.000000e+00> : vector<2x8x32xf32>
    %24 = tpu.matmul %17, %5, %cst_21 {dimension_numbers = #tpu.dot_dimension_numbers<[2], [1], [1], [2], [0, 0, 0, 1, 1, 2], [0], [0]>} : vector<2x8x8xf32>, vector<2x8x32xf32>, vector<2x8x32xf32> -> vector<2x8x32xf32>
    %c0_22 = arith.constant 0 : index
    %c0_23 = arith.constant 0 : index
    %c0_24 = arith.constant 0 : index
    %25 = vector.load %arg9[%c0_22, %c0_23, %c0_24] : memref<2x8x32xf32, #tpu.memory_space<vmem>>, vector<2x8x32xf32>
    %26 = vector.broadcast %14 : vector<2x8x1xf32> to vector<2x8x32xf32>
    %27 = arith.mulf %26, %25 : vector<2x8x32xf32>
    %28 = arith.addf %27, %24 : vector<2x8x32xf32>
    %c0_25 = arith.constant 0 : index
    %c0_26 = arith.constant 0 : index
    %c0_27 = arith.constant 0 : index
    %29 = vector.load %arg9[%c0_25, %c0_26, %c0_27] : memref<2x8x32xf32, #tpu.memory_space<vmem>>, vector<2x8x32xf32>
    tpu.vector_store %arg9[%c0_25, %c0_26, %c0_27], %28 {strides = array<i32>} : memref<2x8x32xf32, #tpu.memory_space<vmem>>, vector<2x8x32xf32>,
    %c0_28 = arith.constant 0 : index
    %c0_29 = arith.constant 0 : index
    %c0_30 = arith.constant 0 : index
    %30 = vector.load %arg7[%c0_28, %c0_29, %c0_30] : memref<2x8x1xf32, #tpu.memory_space<vmem>>, vector<2x8x1xf32>
    tpu.vector_store %arg7[%c0_28, %c0_29, %c0_30], %12 {strides = array<i32>} : memref<2x8x1xf32, #tpu.memory_space<vmem>>, vector<2x8x1xf32>,
    %c0_i32_31 = arith.constant 0 : i32
    %31 = arith.cmpi eq, %arg2, %c0_i32_31 : i32
    %32 = arith.extui %31 : i1 to i32
    %c0_i32_32 = arith.constant 0 : i32
    %33 = arith.cmpi ne, %32, %c0_i32_32 : i32
    scf.if %33 {
      %c0_33 = arith.constant 0 : index
      %c0_34 = arith.constant 0 : index
      %c0_35 = arith.constant 0 : index
      %34 = vector.load %arg8[%c0_33, %c0_34, %c0_35] : memref<2x8x1xf32, #tpu.memory_space<vmem>>, vector<2x8x1xf32>
      %35 = tpu.reciprocal %34 : vector<2x8x1xf32> -> vector<2x8x1xf32>
      %c0_36 = arith.constant 0 : index
      %c0_37 = arith.constant 0 : index
      %c0_38 = arith.constant 0 : index
      %36 = vector.load %arg9[%c0_36, %c0_37, %c0_38] : memref<2x8x32xf32, #tpu.memory_space<vmem>>, vector<2x8x32xf32>
      %37 = vector.broadcast %35 : vector<2x8x1xf32> to vector<2x8x32xf32>
      %38 = arith.mulf %36, %37 : vector<2x8x32xf32>
      %39 = vector.extract_strided_slice %38 {offsets = [0, 0, 0], sizes = [1, 8, 32], strides = [1, 1, 1]} : vector<2x8x32xf32> to vector<1x8x32xf32>
      %40 = vector.shape_cast %39 : vector<1x8x32xf32> to vector<8x32xf32>
      %c0_39 = arith.constant 0 : index
      %c0_40 = arith.constant 0 : index
      %c0_41 = arith.constant 0 : index
      %41 = vector.load %arg6[%c0_39, %c0_40, %c0_41] : memref<1x8x64xf32, #tpu.memory_space<vmem>>, vector<1x8x32xf32>
      %42 = vector.shape_cast %41 : vector<1x8x32xf32> to vector<8x32xf32>
      %43 = vector.shape_cast %40 : vector<8x32xf32> to vector<1x8x32xf32>
      tpu.vector_store %arg6[%c0_39, %c0_40, %c0_41], %43 {strides = array<i32>} : memref<1x8x64xf32, #tpu.memory_space<vmem>>, vector<1x8x32xf32>,
      %44 = vector.extract_strided_slice %38 {offsets = [1, 0, 0], sizes = [1, 8, 32], strides = [1, 1, 1]} : vector<2x8x32xf32> to vector<1x8x32xf32>
      %45 = vector.shape_cast %44 : vector<1x8x32xf32> to vector<8x32xf32>
      %c0_42 = arith.constant 0 : index
      %c0_43 = arith.constant 0 : index
      %c32 = arith.constant 32 : index
      %46 = vector.load %arg6[%c0_42, %c0_43, %c32] : memref<1x8x64xf32, #tpu.memory_space<vmem>>, vector<1x8x32xf32>
      %47 = vector.shape_cast %46 : vector<1x8x32xf32> to vector<8x32xf32>
      %48 = vector.shape_cast %45 : vector<8x32xf32> to vector<1x8x32xf32>
      tpu.vector_store %arg6[%c0_42, %c0_43, %c32], %48 {strides = array<i32>} : memref<1x8x64xf32, #tpu.memory_space<vmem>>, vector<1x8x32xf32>,
    } else {
    }
    return
  }
  func.func @transform_0(%arg0: i32, %arg1: i32, %arg2: i32) -> (i32, i32, i32) {
    %c0_i32 = arith.constant 0 : i32
    %c0_i32_0 = arith.constant 0 : i32
    return %arg0, %arg1, %c0_i32 : i32, i32, i32
  }
  func.func @transform_1(%arg0: i32, %arg1: i32, %arg2: i32) -> (i32, i32, i32) {
    %c0_i32 = arith.constant 0 : i32
    %c0_i32_0 = arith.constant 0 : i32
    return %arg0, %arg2, %c0_i32 : i32, i32, i32
  }
  func.func @transform_2(%arg0: i32, %arg1: i32, %arg2: i32) -> (i32, i32, i32) {
    %c0_i32 = arith.constant 0 : i32
    %c0_i32_0 = arith.constant 0 : i32
    return %arg0, %arg2, %c0_i32 : i32, i32, i32
  }
  func.func @transform_3(%arg0: i32, %arg1: i32, %arg2: i32) -> (i32, i32, i32) {
    %c0_i32 = arith.constant 0 : i32
    %c0_i32_0 = arith.constant 0 : i32
    return %arg0, %arg1, %c0_i32 : i32, i32, i32
  }
}

</mosaic_0001>

<llo_original>
// kernel: tpu_custom_call.1
$region0: #{tpu_custom_call.1}
  #allocation0 [shape = 'u32[]', space=smem, size = 0x4, offset = 0x4, fixed_abs, tag = 'smem constant byte address 0x4 - core index']
  #allocation1 [shape = 'u32[72,128]{1,0:T(1,128)}', space=vmem, size = 0x9000, scoped, tag = 'internal scratch']
  #allocation2 [shape = 'f32[2,8,1]{2,1,0:T(8,128)}', space=vmem, size = 0x2000, scoped, tag = 'scratch operand']
  #allocation3 [shape = 'f32[2,8,1]{2,1,0:T(8,128)}', space=vmem, size = 0x2000, scoped, tag = 'scratch operand']
  #allocation4 [shape = 'f32[2,8,32]{2,1,0:T(8,128)}', space=vmem, size = 0x2000, scoped, tag = 'scratch operand']
  %s0 = inlined_call_operand.hbm [shape: f32[4,8,32], index: 0, kind: input, shape index: {}]
  %s1 = inlined_call_operand.hbm [shape: f32[4,8,32], index: 1, kind: input, shape index: {}]
  %s2 = inlined_call_operand.hbm [shape: f32[4,8,32], index: 2, kind: input, shape index: {}]
  %s3 = inlined_call_operand.hbm [shape: f32[2,8,64], index: 3, kind: output, shape index: {}]
  %s4 = sld [smem:[#allocation0]]
  $region65: #{tpu_custom_call.1} parent=0
    _
  %s6 = ssub.s32 1, %s4
  %s7 = scalar_select 0, %s6, %s4
  $region1: #{tpu_custom_call.1} parent=0
    #allocation5 [shape = 'u8[16384]{0}', space=vmem, size = 0x4000, scoped, tag = 'input window, operand 0']
    #allocation6 [shape = 's32[2]{0}', space=sflag, size = 0x8, scoped, tag = 'scoped memory for tpu_custom_call.1']
    #allocation7 [shape = 's32[2]{0}', space=sflag, size = 0x8, scoped, tag = 'scoped memory for tpu_custom_call.1']
    #allocation8 [shape = 'u8[16384]{0}', space=vmem, size = 0x4000, scoped, tag = 'input window, operand 1']
    #allocation9 [shape = 's32[2]{0}', space=sflag, size = 0x8, scoped, tag = 'scoped memory for tpu_custom_call.1']
    #allocation10 [shape = 'u8[16384]{0}', space=vmem, size = 0x4000, scoped, tag = 'input window, operand 2']
    #allocation11 [shape = 'u8[8192]{0}', space=vmem, size = 0x2000, scoped, tag = 'output window, operand 0']
    %8 = vsyncpa [#allocation6], 0
    %s9 = scalar_lea.sflag [#allocation6], 1
    %10 = vsyncpa %s9, 0
    %11 = vsyncpa [#allocation9], 0
    %s12 = scalar_lea.sflag [#allocation9], 1
    %13 = vsyncpa %s12, 0
    %14 = vsyncpa [#allocation7], 0
    %s15 = scalar_lea.sflag [#allocation7], 1
    %16 = vsyncpa %s15, 0
    loop: start=0, step=1, limit=4
    $region2: #{tpu_custom_call.1} parent=1 // loop_pre_header
      _
    $region3: #{tpu_custom_call.1} parent=1 // loop_header
      %s18 = sphi 0, %s22
      %p19 = scmp.ge.s32.totalorder %s18, 4
      %s25 = sphi 0, %s44
      %s26 = sphi 0, %s40
      %s27 = sphi 0, %s36
      %s28 = sphi 0, %s25
      %s29 = sphi 0, %s26
      %s30 = sphi 0, %s27
      %s31 = sphi 0, %s28
      %s32 = sphi 0, %s29
      %s33 = sphi 0, %s30
      %s49 = sphi 0, %s51
      %s52 = sphi 0, %s49
      %s53 = sphi 0, %s52
      %s69 = sphi 0, %s53
      %s77 = sphi 0, %s79
      %s80 = sphi 0, %s77
      %s81 = sphi 0, %s80
      %s97 = sphi 0, %s81
      %s105 = sphi 0, %s107
      %s108 = sphi 0, %s105
      %s109 = sphi 0, %s108
      %s125 = sphi 0, %s109
      %s133 = sphi 0, %s135
      %s136 = sphi 0, %s133
      %s137 = sphi 0, %s136
      %s153 = sphi 0, %s137
    $region4: #{tpu_custom_call.1} parent=1 // loop_header_branch
      %21 = sbr.rel (%p19) target = $region8
    $region5: #{tpu_custom_call.1} parent=1 // loop_body
      %s23 = ssub.s32 %s18, 1
      %s24 = ssub.s32 %s18, 2
      %s34 = sadd.s32 1, %s27
      %p35 = scmp.ge.s32.totalorder %s34, 1
      %s36 = scalar_select %p35, 0, %s34
      %s37 = sadd.s32 1, %s26
      %s38 = scalar_select %p35, %s37, %s26
      %p39 = scmp.ge.s32.totalorder %s38, 1
      %s40 = scalar_select %p39, 0, %s38
      %s41 = sadd.s32 1, %s25
      %s42 = scalar_select %p39, %s41, %s25
      %p43 = scmp.ge.s32.totalorder %s42, 2
      %s44 = scalar_select %p43, 0, %s42
      %s45 = ssub.s32 %s25, %s44
      %s46 = ssub.s32 %s26, %s40
      %s47 = sor.u32 %s45, %s46
      %p48 = scmp.eq.s32.totalorder %s47, 0
      %s50 = sadd.s32 %s49, 1
      %s51 = scalar_select %p48, %s49, %s50
      %p54 = pneg %p48
      %p55 = scmp.eq.s32.totalorder %s18, 1
      %p56 = por %p54, %p55
      %p57 = scmp.ne.s32.totalorder %s49, %s52
      %p58 = scmp.eq.s32.totalorder %s18, 0
      %p59 = por %p57, %p58
      %p60 = scmp.ne.s32.totalorder %s49, %s52
      %p61 = scmp.eq.s32.totalorder %s23, 1
      %p62 = por %p60, %p61
      %p63 = scmp.ne.s32.totalorder %s52, %s53
      %p64 = scmp.eq.s32.totalorder %s23, 0
      %p65 = por %p63, %p64
      %p66 = scmp.ne.s32.totalorder %s52, %s53
      %p67 = scmp.eq.s32.totalorder %s24, 1
      %p68 = por %p66, %p67
      %p70 = scmp.ne.s32.totalorder %s53, %s69
      %p71 = scmp.eq.s32.totalorder %s24, 0
      %p72 = por %p70, %p71
      %s73 = ssub.s32 %s25, %s44
      %s74 = ssub.s32 %s27, %s36
      %s75 = sor.u32 %s73, %s74
      %p76 = scmp.eq.s32.totalorder %s75, 0
      %s78 = sadd.s32 %s77, 1
      %s79 = scalar_select %p76, %s77, %s78
      %p82 = pneg %p76
      %p83 = scmp.eq.s32.totalorder %s18, 1
      %p84 = por %p82, %p83
      %p85 = scmp.ne.s32.totalorder %s77, %s80
      %p86 = scmp.eq.s32.totalorder %s18, 0
      %p87 = por %p85, %p86
      %p88 = scmp.ne.s32.totalorder %s77, %s80
      %p89 = scmp.eq.s32.totalorder %s23, 1
      %p90 = por %p88, %p89
      %p91 = scmp.ne.s32.totalorder %s80, %s81
      %p92 = scmp.eq.s32.totalorder %s23, 0
      %p93 = por %p91, %p92
      %p94 = scmp.ne.s32.totalorder %s80, %s81
      %p95 = scmp.eq.s32.totalorder %s24, 1
      %p96 = por %p94, %p95
      %p98 = scmp.ne.s32.totalorder %s81, %s97
      %p99 = scmp.eq.s32.totalorder %s24, 0
      %p100 = por %p98, %p99
      %s101 = ssub.s32 %s25, %s44
      %s102 = ssub.s32 %s27, %s36
      %s103 = sor.u32 %s101, %s102
      %p104 = scmp.eq.s32.totalorder %s103, 0
      %s106 = sadd.s32 %s105, 1
      %s107 = scalar_select %p104, %s105, %s106
      %p110 = pneg %p104
      %p111 = scmp.eq.s32.totalorder %s18, 1
      %p112 = por %p110, %p111
      %p113 = scmp.ne.s32.totalorder %s105, %s108
      %p114 = scmp.eq.s32.totalorder %s18, 0
      %p115 = por %p113, %p114
      %p116 = scmp.ne.s32.totalorder %s105, %s108
      %p117 = scmp.eq.s32.totalorder %s23, 1
      %p118 = por %p116, %p117
      %p119 = scmp.ne.s32.totalorder %s108, %s109
      %p120 = scmp.eq.s32.totalorder %s23, 0
      %p121 = por %p119, %p120
      %p122 = scmp.ne.s32.totalorder %s108, %s109
      %p123 = scmp.eq.s32.totalorder %s24, 1
      %p124 = por %p122, %p123
      %p126 = scmp.ne.s32.totalorder %s109, %s125
      %p127 = scmp.eq.s32.totalorder %s24, 0
      %p128 = por %p126, %p127
      %s129 = ssub.s32 %s25, %s44
      %s130 = ssub.s32 %s26, %s40
      %s131 = sor.u32 %s129, %s130
      %p132 = scmp.eq.s32.totalorder %s131, 0
      %s134 = sadd.s32 %s133, 1
      %s135 = scalar_select %p132, %s133, %s134
      %p138 = pneg %p132
      %p139 = scmp.eq.s32.totalorder %s18, 1
      %p140 = por %p138, %p139
      %p141 = scmp.ne.s32.totalorder %s133, %s136
      %p142 = scmp.eq.s32.totalorder %s18, 0
      %p143 = por %p141, %p142
      %p144 = scmp.ne.s32.totalorder %s133, %s136
      %p145 = scmp.eq.s32.totalorder %s23, 1
      %p146 = por %p144, %p145
      %p147 = scmp.ne.s32.totalorder %s136, %s137
      %p148 = scmp.eq.s32.totalorder %s23, 0
      %p149 = por %p147, %p148
      %p150 = scmp.ne.s32.totalorder %s136, %s137
      %p151 = scmp.eq.s32.totalorder %s24, 1
      %p152 = por %p150, %p151
      %p154 = scmp.ne.s32.totalorder %s137, %s153
      %p155 = scmp.eq.s32.totalorder %s24, 0
      %p156 = por %p154, %p155
      %p157 = scmp.le.s32.totalorder 1, %s18
      %p158 = scmp.lt.s32.totalorder %s18, 3
      %p159 = pnand %p157, %p158
      %p160 = pneg %p159
      // Predicated region
      $region9: #{tpu_custom_call.1} parent=5 // pred_check
        _
      $region10: #{tpu_custom_call.1} parent=5 // pred_check_branch
        %162 = sbr.rel (%p159) target = $region12
      $region11: #{tpu_custom_call.1} parent=5 // pred_region
        %s163 = ssub.s32 %s18, 1
      $region12: #{tpu_custom_call.1} parent=5 // pred_fallthru
        _
      %p164 = scmp.lt.s32.totalorder %s18, 2
      // Predicated region
      $region13: #{tpu_custom_call.1} parent=5 // pred_check
        %p165 = pneg %p164
      $region14: #{tpu_custom_call.1} parent=5 // pred_check_branch
        %167 = sbr.rel (%p165) target = $region16
      $region15: #{tpu_custom_call.1} parent=5 // pred_region
        // Predicated region
        $region17: #{tpu_custom_call.1} parent=15 // pred_check
          %p168 = pneg %p59
        $region18: #{tpu_custom_call.1} parent=15 // pred_check_branch
          %170 = sbr.rel (%p168) target = $region20
        $region19: #{tpu_custom_call.1} parent=15 // pred_region
          %s171 = sand.u32 %s49, 1
          %s172 = scalar_lea.sflag [#allocation6], %s171
          %s173 = sand.u32 %s49, 1
          %s174 = smul.addr %s173, 16
          %s175 = scalar_lea.vmem [#allocation5], %s174
          %s176 = smul.u32 2, %s25
          %178 = vsyncadd %s172, 0
          %s179 = sadd.s32 %s26, %s176
          %s180 = smul.addr %s179, 8
          %s181 = scalar_lea.hbm %s0, %s180
          %s182 = sshll.u32 %s181, 4
          %s183 = int_to_ptr.hbm [resolvable:$true] %s182
          %s184 = sshll.u32 %s175, 4
          %s185 = int_to_ptr.vmem [resolvable:$true] %s184
          %190 = dma.hbm_to_vmem [thread:$0]  %s183, 256, %s185, %s172, 128, 128, 8
        $region20: #{tpu_custom_call.1} parent=15 // pred_fallthru
          _
        // Predicated region
        $region21: #{tpu_custom_call.1} parent=15 // pred_check
          %p191 = pneg %p87
        $region22: #{tpu_custom_call.1} parent=15 // pred_check_branch
          %193 = sbr.rel (%p191) target = $region24
        $region23: #{tpu_custom_call.1} parent=15 // pred_region
          %s194 = sand.u32 %s18, 1
          %s195 = scalar_lea.sflag [#allocation9], %s194
          %s196 = sand.u32 %s77, 1
          %s197 = smul.addr %s196, 16
          %s198 = scalar_lea.vmem [#allocation8], %s197
          %s199 = smul.u32 2, %s25
          %201 = vsyncadd %s195, 0
          %s202 = sadd.s32 %s27, %s199
          %s203 = smul.addr %s202, 8
          %s204 = scalar_lea.hbm %s1, %s203
          %s205 = sshll.u32 %s204, 4
          %s206 = int_to_ptr.hbm [resolvable:$true] %s205
          %s207 = sshll.u32 %s198, 4
          %s208 = int_to_ptr.vmem [resolvable:$true] %s207
          %213 = dma.hbm_to_vmem [thread:$0]  %s206, 256, %s208, %s195, 128, 128, 8
        $region24: #{tpu_custom_call.1} parent=15 // pred_fallthru
          _
        // Predicated region
        $region25: #{tpu_custom_call.1} parent=15 // pred_check
          %p214 = pneg %p115
        $region26: #{tpu_custom_call.1} parent=15 // pred_check_branch
          %216 = sbr.rel (%p214) target = $region28
        $region27: #{tpu_custom_call.1} parent=15 // pred_region
          %s217 = sand.u32 %s18, 1
          %s218 = scalar_lea.sflag [#allocation9], %s217
          %s219 = sand.u32 %s105, 1
          %s220 = smul.addr %s219, 16
          %s221 = scalar_lea.vmem [#allocation10], %s220
          %s222 = smul.u32 2, %s25
          %224 = vsyncadd %s218, 0
          %s225 = sadd.s32 %s27, %s222
          %s226 = smul.addr %s225, 8
          %s227 = scalar_lea.hbm %s2, %s226
          %s228 = sshll.u32 %s227, 4
          %s229 = int_to_ptr.hbm [resolvable:$true] %s228
          %s230 = sshll.u32 %s221, 4
          %s231 = int_to_ptr.vmem [resolvable:$true] %s230
          %236 = dma.hbm_to_vmem [thread:$0]  %s229, 256, %s231, %s218, 128, 128, 8
        $region28: #{tpu_custom_call.1} parent=15 // pred_fallthru
          _
      $region16: #{tpu_custom_call.1} parent=5 // pred_fallthru
        _
      %p237 = scmp.le.s32.totalorder 1, %s18
      %p238 = scmp.lt.s32.totalorder %s18, 3
      %p239 = pnand %p237, %p238
      %p240 = pneg %p239
      // Predicated region
      $region29: #{tpu_custom_call.1} parent=5 // pred_check
        _
      $region30: #{tpu_custom_call.1} parent=5 // pred_check_branch
        %242 = sbr.rel (%p239) target = $region32
      $region31: #{tpu_custom_call.1} parent=5 // pred_region
        %s243 = ssub.s32 %s18, 1
        %s244 = sand.u32 %s52, 1
        %s245 = scalar_lea.sflag [#allocation6], %s244
        %s246 = sand.u32 %s52, 1
        %s247 = smul.addr %s246, 16
        %s248 = scalar_lea.vmem [#allocation5], %s247
        // Predicated region
        $region33: #{tpu_custom_call.1} parent=31 // pred_check
          %p249 = pneg %p65
        $region34: #{tpu_custom_call.1} parent=31 // pred_check_branch
          %251 = sbr.rel (%p249) target = $region36
        $region35: #{tpu_custom_call.1} parent=31 // pred_region
          %253 = dma.done %s245, 256
        $region36: #{tpu_custom_call.1} parent=31 // pred_fallthru
          _
        %s254 = sand.u32 %s23, 1
        %s255 = scalar_lea.sflag [#allocation9], %s254
        %s256 = sand.u32 %s80, 1
        %s257 = smul.addr %s256, 16
        %s258 = scalar_lea.vmem [#allocation8], %s257
        // Predicated region
        $region37: #{tpu_custom_call.1} parent=31 // pred_check
          %p259 = pneg %p93
        $region38: #{tpu_custom_call.1} parent=31 // pred_check_branch
          %261 = sbr.rel (%p259) target = $region40
        $region39: #{tpu_custom_call.1} parent=31 // pred_region
          %263 = dma.done %s255, 256
        $region40: #{tpu_custom_call.1} parent=31 // pred_fallthru
          _
        %s264 = sand.u32 %s23, 1
        %s265 = scalar_lea.sflag [#allocation9], %s264
        %s266 = sand.u32 %s108, 1
        %s267 = smul.addr %s266, 16
        %s268 = scalar_lea.vmem [#allocation10], %s267
        // Predicated region
        $region41: #{tpu_custom_call.1} parent=31 // pred_check
          %p269 = pneg %p121
        $region42: #{tpu_custom_call.1} parent=31 // pred_check_branch
          %271 = sbr.rel (%p269) target = $region44
        $region43: #{tpu_custom_call.1} parent=31 // pred_region
          %273 = dma.done %s265, 256
        $region44: #{tpu_custom_call.1} parent=31 // pred_fallthru
          _
        %s274 = sand.u32 %s52, 1
        %s275 = scalar_lea.sflag [#allocation6], %s274
        %s276 = sand.u32 %s52, 1
        %s277 = smul.addr %s276, 16
        %s278 = scalar_lea.vmem [#allocation5], %s277
        %p279 = pneg %p65
        %p280 = pneg %p62
        %s281 = sand.u32 %s23, 1
        %s282 = scalar_lea.sflag [#allocation9], %s281
        %s283 = sand.u32 %s80, 1
        %s284 = smul.addr %s283, 16
        %s285 = scalar_lea.vmem [#allocation8], %s284
        %p286 = pneg %p93
        %p287 = pneg %p90
        %s288 = sand.u32 %s23, 1
        %s289 = scalar_lea.sflag [#allocation9], %s288
        %s290 = sand.u32 %s108, 1
        %s291 = smul.addr %s290, 16
        %s292 = scalar_lea.vmem [#allocation10], %s291
        %p293 = pneg %p121
        %p294 = pneg %p118
        %p295 = pneg %p149
        %p296 = pneg %p146
        %s297 = sand.u32 %s136, 1
        %s298 = scalar_lea.sflag [#allocation7], %s297
        %s299 = sand.u32 %s136, 1
        %s300 = smul.addr %s299, 8
        %s301 = scalar_lea.vmem [#allocation11], %s300
        %s302 = smul.u32 2, %s28
        %s303 = smul.u32 2, %s28
        %s304 = smul.u32 2, %s28
        %p305 = scmp.eq.s32.totalorder %s30, 0
        // Predicated region
        $region45: #{tpu_custom_call.1} parent=31 // pred_check
          %p306 = pneg %p305
        $region46: #{tpu_custom_call.1} parent=31 // pred_check_branch
          %308 = sbr.rel (%p306) target = $region48
        $region47: #{tpu_custom_call.1} parent=31 // pred_region
          %vm309 = vcmask 7168
          %310 = vst.msk [vmem:[#allocation2] sm:$0xff] %vm309, -inf
          %311 = vst.msk [vmem:[#allocation2 + $0x8] sm:$0xff] %vm309, -inf
          %312 = vst.msk [vmem:[#allocation3] sm:$0xff] %vm309, 0.0
          %313 = vst.msk [vmem:[#allocation3 + $0x8] sm:$0xff] %vm309, 0.0
          %vm314 = vcmask 261120
          %315 = vst.msk [vmem:[#allocation4] sm:$0xff] %vm314, 0.0
          %316 = vst.msk [vmem:[#allocation4 + $0x8] sm:$0xff] %vm314, 0.0
        $region48: #{tpu_custom_call.1} parent=31 // pred_fallthru
          _
        %v317 = vld [vmem:[%s248] sm:$0xff]
        %v318 = vld [vmem:[%s248 + $0x8] sm:$0xff]
        %v319 = vld [vmem:[%s258] sm:$0xff]
        %v320 = vld [vmem:[%s258 + $0x8] sm:$0xff]
        %v321 = vld [vmem:[%s268] sm:$0xff]
        %v322 = vld [vmem:[%s268 + $0x8] sm:$0xff]
        %v323 = vmul.f32 %v317, 0.17677669
        %v324 = vmul.f32 %v318, 0.17677669
        %vm325 = vcmask 261120
        %v327 = vsel %vm325, %v323, 0
        %v330 = vsel %vm325, %v319, 0
        %332 = vmatpush.xpose.msra.mxu0 0.0
        %333 = vmatpush.xpose.msra.mxu0 0.0
        %334 = vmatpush.xpose.msra.mxu0 0.0
        %335 = vmatpush.xpose.msra.mxu0 0.0
        %336 = vmatpush.xpose.msra.mxu0 0.0
        %337 = vmatpush.xpose.msra.mxu0 0.0
        %338 = vmatpush.xpose.msra.mxu0 0.0
        %339 = vmatpush.xpose.msra.mxu0 0.0
        %340 = vmatpush.xpose.msra.mxu0 0.0
        %341 = vmatpush.xpose.msra.mxu0 0.0
        %342 = vmatpush.xpose.msra.mxu0 0.0
        %343 = vmatpush.xpose.msra.mxu0 0.0
        %344 = vmatpush.xpose.msra.mxu0 0.0
        %345 = vmatpush.xpose.msra.mxu0 0.0
        %346 = vmatpush.xpose.msra.mxu0 0.0
        %347 = vmatpush.xpose.msra.mxu0 %v330
        %348 = vmatmul.f32.gmra.mxu0 %v327
        %v349 = vpop.f32.mrf.mxu0
        %v350 = vadd.f32 0.0, %v349
        %351 = vdwg.mxu0
        %v353 = vsel %vm325, %v324, 0
        %v356 = vsel %vm325, %v320, 0
        %358 = vmatpush.xpose.msra.mxu0 0.0
        %359 = vmatpush.xpose.msra.mxu0 0.0
        %360 = vmatpush.xpose.msra.mxu0 0.0
        %361 = vmatpush.xpose.msra.mxu0 0.0
        %362 = vmatpush.xpose.msra.mxu0 0.0
        %363 = vmatpush.xpose.msra.mxu0 0.0
        %364 = vmatpush.xpose.msra.mxu0 0.0
        %365 = vmatpush.xpose.msra.mxu0 0.0
        %366 = vmatpush.xpose.msra.mxu0 0.0
        %367 = vmatpush.xpose.msra.mxu0 0.0
        %368 = vmatpush.xpose.msra.mxu0 0.0
        %369 = vmatpush.xpose.msra.mxu0 0.0
        %370 = vmatpush.xpose.msra.mxu0 0.0
        %371 = vmatpush.xpose.msra.mxu0 0.0
        %372 = vmatpush.xpose.msra.mxu0 0.0
        %373 = vmatpush.xpose.msra.mxu0 %v356
        %374 = vmatmul.f32.gmra.mxu0 %v353
        %v375 = vpop.f32.mrf.mxu0
        %v376 = vadd.f32 0.0, %v375
        %377 = vdwg.mxu0
        %v378 = vld [vmem:[#allocation2] sm:$0xff]
        %v379 = vld [vmem:[#allocation2 + $0x8] sm:$0xff]
        %vm380 = vcmask 64512
        %v381 = vsel %vm380, %v350, -inf
        %382 = vmax.xlane.f32.xlu0 %v381
        %v383 = vpop.xlane.xlu0 %382
        %v384 = vsel %vm380, %v376, -inf
        %385 = vmax.xlane.f32.xlu0 %v384
        %v386 = vpop.xlane.xlu0 %385
        %v387 = vmax.f32 %v378, %v383
        %v388 = vmax.f32 %v379, %v386
        %v389 = vsub.f32 %v378, %v387
        %v390 = vsub.f32 %v379, %v388
        %v391 = vmul.f32 %v389, 1.442695
        %v392 = vpow.pop %v391
        %v393 = vmul.f32 %v390, 1.442695
        %v394 = vpow.pop %v393
        %396 = vset.pattern.permute.xlu0 0
        %397 = vperm.xlu0 %396, %v387
        %v398 = vpop.permute.xlu0 %397
        %401 = vset.pattern.permute.xlu0 0
        %402 = vperm.xlu0 %401, %v388
        %v403 = vpop.permute.xlu0 %402
        %v405 = vsub.f32 %v350, %v398
        %v406 = vsub.f32 %v376, %v403
        %v407 = vmul.f32 %v405, 1.442695
        %v408 = vpow.pop %v407
        %v409 = vmul.f32 %v406, 1.442695
        %v410 = vpow.pop %v409
        %v411 = vld [vmem:[#allocation3] sm:$0xff]
        %v412 = vld [vmem:[#allocation3 + $0x8] sm:$0xff]
        %v413 = vmul.f32 %v392, %v411
        %v414 = vmul.f32 %v394, %v412
        %v415 = vsel %vm380, %v408, 0.0
        %416 = vadd.xlane.f32.xlu0 %v415
        %v417 = vpop.xlane.xlu0 %416
        %v418 = vsel %vm380, %v410, 0.0
        %419 = vadd.xlane.f32.xlu0 %v418
        %v420 = vpop.xlane.xlu0 %419
        %v421 = vadd.f32 %v413, %v417
        %v422 = vadd.f32 %v414, %v420
        %vm423 = vcmask 7168
        %424 = vst.msk [vmem:[#allocation3] sm:$0xff] %vm423, %v421
        %425 = vst.msk [vmem:[#allocation3 + $0x8] sm:$0xff] %vm423, %v422
        %v427 = vsel %vm380, %v408, 0
        %429 = vmatpush.msra.mxu0 0.0
        %430 = vmatpush.msra.mxu0 0.0
        %431 = vmatpush.msra.mxu0 0.0
        %432 = vmatpush.msra.mxu0 0.0
        %433 = vmatpush.msra.mxu0 0.0
        %434 = vmatpush.msra.mxu0 0.0
        %435 = vmatpush.msra.mxu0 0.0
        %436 = vmatpush.msra.mxu0 0.0
        %437 = vmatpush.msra.mxu0 0.0
        %438 = vmatpush.msra.mxu0 0.0
        %439 = vmatpush.msra.mxu0 0.0
        %440 = vmatpush.msra.mxu0 0.0
        %441 = vmatpush.msra.mxu0 0.0
        %442 = vmatpush.msra.mxu0 0.0
        %443 = vmatpush.msra.mxu0 0.0
        %444 = vmatpush.msra.mxu0 %v321
        %445 = vmatmul.f32.gmra.mxu0 %v427
        %v446 = vpop.f32.mrf.mxu0
        %v447 = vadd.f32 0.0, %v446
        %448 = vdwg.mxu0
        %v450 = vsel %vm380, %v410, 0
        %452 = vmatpush.msra.mxu0 0.0
        %453 = vmatpush.msra.mxu0 0.0
        %454 = vmatpush.msra.mxu0 0.0
        %455 = vmatpush.msra.mxu0 0.0
        %456 = vmatpush.msra.mxu0 0.0
        %457 = vmatpush.msra.mxu0 0.0
        %458 = vmatpush.msra.mxu0 0.0
        %459 = vmatpush.msra.mxu0 0.0
        %460 = vmatpush.msra.mxu0 0.0
        %461 = vmatpush.msra.mxu0 0.0
        %462 = vmatpush.msra.mxu0 0.0
        %463 = vmatpush.msra.mxu0 0.0
        %464 = vmatpush.msra.mxu0 0.0
        %465 = vmatpush.msra.mxu0 0.0
        %466 = vmatpush.msra.mxu0 0.0
        %467 = vmatpush.msra.mxu0 %v322
        %468 = vmatmul.f32.gmra.mxu0 %v450
        %v469 = vpop.f32.mrf.mxu0
        %v470 = vadd.f32 0.0, %v469
        %471 = vdwg.mxu0
        %v472 = vld [vmem:[#allocation4] sm:$0xff]
        %v473 = vld [vmem:[#allocation4 + $0x8] sm:$0xff]
        %475 = vset.pattern.permute.xlu0 0
        %476 = vperm.xlu0 %475, %v392
        %v477 = vpop.permute.xlu0 %476
        %480 = vset.pattern.permute.xlu0 0
        %481 = vperm.xlu0 %480, %v394
        %v482 = vpop.permute.xlu0 %481
        %v484 = vmul.f32 %v477, %v472
        %v485 = vmul.f32 %v482, %v473
        %v486 = vadd.f32 %v484, %v447
        %v487 = vadd.f32 %v485, %v470
        %488 = vst.msk [vmem:[#allocation4] sm:$0xff] %vm325, %v486
        %489 = vst.msk [vmem:[#allocation4 + $0x8] sm:$0xff] %vm325, %v487
        %490 = vst.msk [vmem:[#allocation2] sm:$0xff] %vm423, %v387
        %491 = vst.msk [vmem:[#allocation2 + $0x8] sm:$0xff] %vm423, %v388
        // Predicated region
        $region49: #{tpu_custom_call.1} parent=31 // pred_check
          %p492 = pneg %p305
        $region50: #{tpu_custom_call.1} parent=31 // pred_check_branch
          %494 = sbr.rel (%p492) target = $region52
        $region51: #{tpu_custom_call.1} parent=31 // pred_region
          %v495 = vld [vmem:[#allocation3] sm:$0xff]
          %v496 = vld [vmem:[#allocation3 + $0x8] sm:$0xff]
          %v497 = vrcp.pop %v495
          %v498 = vmul.f32 %v495, %v497
          %v499 = vsub.f32 1.0, %v498
          %v500 = vmul.f32 %v497, %v499
          %v501 = vadd.f32 %v497, %v500
          %vm502 = vweird.f32 %v495
          %vm503 = vweird.f32 %v497
          %vm504 = vmor %vm502, %vm503
          %v505 = vsel %vm504, %v497, %v501
          %v506 = vand.u32 2147483647, %v495
          %vm507 = vcmp.eq.f32.partialorder %v506, 8.507059e+37
          %v508 = vand.u32 %v495, 2147483648
          %v509 = vor.u32 1.1754944e-38, %v508
          %v510 = vsel %vm507, %v509, %v505
          %v511 = vrcp.pop %v496
          %v512 = vmul.f32 %v496, %v511
          %v513 = vsub.f32 1.0, %v512
          %v514 = vmul.f32 %v511, %v513
          %v515 = vadd.f32 %v511, %v514
          %vm516 = vweird.f32 %v496
          %vm517 = vweird.f32 %v511
          %vm518 = vmor %vm516, %vm517
          %v519 = vsel %vm518, %v511, %v515
          %v520 = vand.u32 2147483647, %v496
          %vm521 = vcmp.eq.f32.partialorder %v520, 8.507059e+37
          %v522 = vand.u32 %v496, 2147483648
          %v523 = vor.u32 1.1754944e-38, %v522
          %v524 = vsel %vm521, %v523, %v519
          %v525 = vld [vmem:[#allocation4] sm:$0xff]
          %v526 = vld [vmem:[#allocation4 + $0x8] sm:$0xff]
          %528 = vset.pattern.permute.xlu0 0
          %529 = vperm.xlu0 %528, %v510
          %v530 = vpop.permute.xlu0 %529
          %533 = vset.pattern.permute.xlu0 0
          %534 = vperm.xlu0 %533, %v524
          %v535 = vpop.permute.xlu0 %534
          %v537 = vmul.f32 %v525, %v530
          %v538 = vmul.f32 %v526, %v535
          %539 = vst.msk [vmem:[%s301] sm:$0xff] %vm325, %v537
          %541 = vrot.lane.b32.xlu0 %v538, 32
          %v542 = vpop.permute.xlu0 %541
          %vm544 = vcmask 523520
          %545 = vst.msk [vmem:[%s301] sm:$0xff] %vm544, %v542
        $region52: #{tpu_custom_call.1} parent=31 // pred_fallthru
          _
        %s546 = sand.u32 %s136, 1
        %s547 = scalar_lea.sflag [#allocation7], %s546
        %s548 = sand.u32 %s136, 1
        %s549 = smul.addr %s548, 8
        %s550 = scalar_lea.vmem [#allocation11], %s549
        // Predicated region
        $region53: #{tpu_custom_call.1} parent=31 // pred_check
          %p551 = pneg %p146
        $region54: #{tpu_custom_call.1} parent=31 // pred_check_branch
          %553 = sbr.rel (%p551) target = $region56
        $region55: #{tpu_custom_call.1} parent=31 // pred_region
          %555 = vsyncadd %s547, 0
          %s556 = sadd.s32 %s29, %s28
          %s557 = smul.addr %s556, 8
          %s558 = scalar_lea.hbm %s3, %s557
          %s560 = sshll.u32 %s550, 4
          %s561 = int_to_ptr.vmem [resolvable:$true] %s560
          %s562 = sshll.u32 %s558, 4
          %s563 = int_to_ptr.hbm [resolvable:$true] %s562
          %565 = dma.vmem_to_hbm [thread:$0]  %s561, 128, %s563, %s547
        $region56: #{tpu_custom_call.1} parent=31 // pred_fallthru
          _
      $region32: #{tpu_custom_call.1} parent=5 // pred_fallthru
        _
      %p566 = scmp.le.s32.totalorder 2, %s18
      // Predicated region
      $region57: #{tpu_custom_call.1} parent=5 // pred_check
        %p567 = pneg %p566
      $region58: #{tpu_custom_call.1} parent=5 // pred_check_branch
        %569 = sbr.rel (%p567) target = $region60
      $region59: #{tpu_custom_call.1} parent=5 // pred_region
        %s570 = ssub.s32 %s18, 2
        // Predicated region
        $region61: #{tpu_custom_call.1} parent=59 // pred_check
          %p571 = pneg %p152
        $region62: #{tpu_custom_call.1} parent=59 // pred_check_branch
          %573 = sbr.rel (%p571) target = $region64
        $region63: #{tpu_custom_call.1} parent=59 // pred_region
          %s574 = sand.u32 %s137, 1
          %s575 = scalar_lea.sflag [#allocation7], %s574
          %s576 = sand.u32 %s137, 1
          %s577 = smul.addr %s576, 8
          %s578 = scalar_lea.vmem [#allocation11], %s577
          %580 = dma.done %s575, 128
        $region64: #{tpu_custom_call.1} parent=59 // pred_fallthru
          _
      $region60: #{tpu_custom_call.1} parent=5 // pred_fallthru
        _
    $region6: #{tpu_custom_call.1} parent=1 // loop_footer
      %s22 = sadd.s32 1, %s18
    $region7: #{tpu_custom_call.1} parent=1 // loop_footer_branch
      %17 = sbr.rel target = $region3
    $region8: #{tpu_custom_call.1} parent=1 // loop_exit
      _
    %581 = vsyncpa [#allocation6], 1
    %s582 = scalar_lea.sflag [#allocation6], 1
    %583 = vsyncpa %s582, 1
    %584 = vsyncpa [#allocation9], 1
    %s585 = scalar_lea.sflag [#allocation9], 1
    %586 = vsyncpa %s585, 1
    %587 = vsyncpa [#allocation7], 1
    %s588 = scalar_lea.sflag [#allocation7], 1
    %589 = vsyncpa %s588, 1

</llo_original>
